<compile_context>
chip_gen: v6e
topology: v6e:2x2x1
jax: 0.10.0
libtpu: 0.0.40
codegen_flags: <defaults>
</compile_context>

<pallas_src>
import jax
import jax.numpy as jnp
from jax.experimental import pallas as pl
from jax.experimental.pallas import tpu as pltpu


_LANE = 128  # pad the hidden dim to a multiple of the lane width


def _round_up(n, m):
    return ((n + m - 1) // m) * m


def _stats_net_kernel(xy_ref, w1_ref, b1_ref, w2_ref, b2_ref, w3r_ref, o_ref):
    cd = w1_ref.dtype  # MXU compute dtype (bf16 by default, f32 if requested)

    # Layer 1: Linear(dx+dy, H) + ReLU (bias-add / ReLU in f32).
    h1 = jnp.dot(xy_ref[...].astype(cd), w1_ref[...],
                 preferred_element_type=jnp.float32)
    h1 = jnp.maximum(h1 + b1_ref[...], 0.0)

    # Layer 2: Linear(H, H) + ReLU.
    h2 = jnp.dot(h1.astype(cd), w2_ref[...],
                 preferred_element_type=jnp.float32)
    h2 = jnp.maximum(h2 + b2_ref[...], 0.0)

    # Layer 3: Linear(H, 1), emitted lane-dense as a (1, TB) row:
    #   out[1, TB] = w3_row(1, H) . h2(TB, H)^T   (contract the last dims on the MXU)
    o_ref[...] = jax.lax.dot_general(
        w3r_ref[...], h2.astype(cd),
        dimension_numbers=(((1,), (1,)), ((), ())),
        preferred_element_type=jnp.float32)


def statistics_network_forward(x, y, params, *, block_b=1024,
                               compute_dtype=jnp.bfloat16):
    """x: [B, dim_x], y: [B, dim_y] -> [B, 1] float32."""
    w1, b1, w2, b2, w3, b3 = params
    B, dx = x.shape
    dy = y.shape[1]
    dxy = dx + dy
    H = w2.shape[0]
    Hp = _round_up(H, _LANE)

    # --- zero-pad hidden dim to a lane multiple (zeros keep the math exact) ---
    w1p = jnp.zeros((dxy, Hp), jnp.float32).at[:, :H].set(w1).astype(compute_dtype)
    w2p = jnp.zeros((Hp, Hp), jnp.float32).at[:H, :H].set(w2).astype(compute_dtype)
    w3r = jnp.zeros((1, Hp), jnp.float32).at[0, :H].set(w3[:, 0]).astype(compute_dtype)
    b1p = jnp.zeros((1, Hp), jnp.float32).at[0, :H].set(b1)
    b2p = jnp.zeros((1, Hp), jnp.float32).at[0, :H].set(b2)

    # --- fold the concat into the wrapper; pad batch to the tile size ---
    xy = jnp.concatenate([x, y], axis=1).astype(jnp.float32)
    TB = _round_up(min(block_b, B), _LANE)          # batch tile, multiple of 128
    Bp = _round_up(B, TB)
    if Bp != B:
        xy = jnp.pad(xy, ((0, Bp - B), (0, 0)))
    n_tiles = Bp // TB

    out_row = pl.pallas_call(
        _stats_net_kernel,
        out_shape=jax.ShapeDtypeStruct((1, Bp), jnp.float32),
        grid=(n_tiles,),
        in_specs=[
            pl.BlockSpec((TB, dxy), lambda i: (i, 0)),   # xy tile (streamed)
            pl.BlockSpec((dxy, Hp), lambda i: (0, 0)),   # W1  (resident)
            pl.BlockSpec((1, Hp), lambda i: (0, 0)),     # b1  (resident)
            pl.BlockSpec((Hp, Hp), lambda i: (0, 0)),    # W2  (resident)
            pl.BlockSpec((1, Hp), lambda i: (0, 0)),     # b2  (resident)
            pl.BlockSpec((1, Hp), lambda i: (0, 0)),     # w3 row (resident)
        ],
        out_specs=pl.BlockSpec((1, TB), lambda i: (0, i)),  # lane-dense output row
        compiler_params=pltpu.CompilerParams(
            dimension_semantics=("parallel",),
            vmem_limit_bytes=32 * 1024 * 1024),
    )(xy, w1p, b1p, w2p, b2p, w3r)

    # b3 is added here (keeps a (1,1) VMEM block / extra DMA lane out of the kernel).
    return out_row[0, :B].reshape(B, 1) + b3.reshape(1, 1)


def init_params(key, dim_x, dim_y, hidden_units):
    """PyTorch-Linear-style uniform init; weights stored as [in_features, out_features]."""
    ks = jax.random.split(key, 6)
    d1 = dim_x + dim_y

    def uni(k, shape, fan_in):
        bound = 1.0 / jnp.sqrt(jnp.float32(fan_in))
        return jax.random.uniform(k, shape, jnp.float32, -bound, bound)

    w1 = uni(ks[0], (d1, hidden_units), d1)
    b1 = uni(ks[1], (hidden_units,), d1)
    w2 = uni(ks[2], (hidden_units, hidden_units), hidden_units)
    b2 = uni(ks[3], (hidden_units,), hidden_units)
    w3 = uni(ks[4], (hidden_units, 1), hidden_units)
    b3 = uni(ks[5], (1,), hidden_units)
    return (w1, b1, w2, b2, w3, b3)


def _reference_forward(x, y, params, compute_dtype=jnp.float32):
    """Pure-JAX reference.  With compute_dtype=bf16 it mimics the kernel's
    MXU-operand casts (f32 accumulation, f32 bias/ReLU)."""
    w1, b1, w2, b2, w3, b3 = params
    cd = compute_dtype
    h = jnp.concatenate([x, y], axis=1)
    h1 = jnp.dot(h.astype(cd), w1.astype(cd),
                 preferred_element_type=jnp.float32) + b1
    h1 = jnp.maximum(h1, 0.0)
    h2 = jnp.dot(h1.astype(cd), w2.astype(cd),
                 preferred_element_type=jnp.float32) + b2
    h2 = jnp.maximum(h2, 0.0)
    return jnp.dot(h2.astype(cd), w3.astype(cd),
                   preferred_element_type=jnp.float32) + b3


if __name__ == "__main__":
    # Small shapes consistent with the module; B=300 exercises batch padding
    # and 3 grid tiles at TB=128; hidden=32 exercises lane-padding to 128.
    B, dim_x, dim_y, hidden = 300, 3, 5, 32

    key = jax.random.PRNGKey(0)
    kx, ky, kp = jax.random.split(key, 3)
    x = jax.random.normal(kx, (B, dim_x), jnp.float32)
    y = jax.random.normal(ky, (B, dim_y), jnp.float32)
    params = init_params(kp, dim_x, dim_y, hidden)

    out = statistics_network_forward(x, y, params, block_b=128,
                                     compute_dtype=jnp.bfloat16)
    out = jax.block_until_ready(out)
    assert out.shape == (B, 1)

    # Check against a reference with matching bf16 operand rounding (tight),
    # and against the exact f32 PyTorch math (loose, bf16-level tolerance).
    ref_bf16 = _reference_forward(x, y, params, compute_dtype=jnp.bfloat16)
    assert jnp.allclose(out, ref_bf16, atol=1e-2, rtol=1e-2)
    ref_f32 = _reference_forward(x, y, params, compute_dtype=jnp.float32)
    assert jnp.allclose(out, ref_f32, atol=1e-1, rtol=1e-1)

    print("KERNEL_OK")
</pallas_src>

<mosaic_0001>
module attributes {stable_mosaic.version = 11 : i64} {
  func.func @_stats_net_kernel(%arg0: i32, %arg1: memref<128x8xf32, #tpu.memory_space<vmem>>, %arg2: memref<8x128xbf16, #tpu.memory_space<vmem>>, %arg3: memref<1x128xf32, #tpu.memory_space<vmem>>, %arg4: memref<128x128xbf16, #tpu.memory_space<vmem>>, %arg5: memref<1x128xf32, #tpu.memory_space<vmem>>, %arg6: memref<1x128xbf16, #tpu.memory_space<vmem>>, %arg7: memref<1x128xf32, #tpu.memory_space<vmem>>) attributes {dimension_semantics = [#tpu.dimension_semantics<parallel>], iteration_bounds = array<i64: 3>, scalar_prefetch = 0 : i64, scratch_operands = 0 : i64, tpu.core_type = #tpu.core_type<tc>, window_params = [{transform_indices = @transform_0, window_bounds = array<i64: 128, 8>}, {pipeline_mode = #tpu.pipeline_mode<synchronous>, transform_indices = @transform_1, window_bounds = array<i64: 8, 128>}, {pipeline_mode = #tpu.pipeline_mode<synchronous>, transform_indices = @transform_2, window_bounds = array<i64: 1, 128>}, {pipeline_mode = #tpu.pipeline_mode<synchronous>, transform_indices = @transform_3, window_bounds = array<i64: 128, 128>}, {pipeline_mode = #tpu.pipeline_mode<synchronous>, transform_indices = @transform_4, window_bounds = array<i64: 1, 128>}, {pipeline_mode = #tpu.pipeline_mode<synchronous>, transform_indices = @transform_5, window_bounds = array<i64: 1, 128>}, {transform_indices = @transform_6, window_bounds = array<i64: 1, 128>}]} {
    %c0 = arith.constant 0 : index
    %c0_0 = arith.constant 0 : index
    %0 = vector.load %arg1[%c0, %c0_0] : memref<128x8xf32, #tpu.memory_space<vmem>>, vector<128x8xf32>
    %1 = arith.truncf %0 : vector<128x8xf32> to vector<128x8xbf16>
    %c0_1 = arith.constant 0 : index
    %c0_2 = arith.constant 0 : index
    %2 = vector.load %arg2[%c0_1, %c0_2] : memref<8x128xbf16, #tpu.memory_space<vmem>>, vector<8x128xbf16>
    %cst = arith.constant dense<0.000000e+00> : vector<128x128xf32>
    %3 = tpu.matmul %1, %2, %cst {dimension_numbers = #tpu.dot_dimension_numbers<[1], [0], [0], [1], [0, 0, 1, 1], [], []>} : vector<128x8xbf16>, vector<8x128xbf16>, vector<128x128xf32> -> vector<128x128xf32>
    %c0_3 = arith.constant 0 : index
    %c0_4 = arith.constant 0 : index
    %4 = vector.load %arg3[%c0_3, %c0_4] : memref<1x128xf32, #tpu.memory_space<vmem>>, vector<1x128xf32>
    %5 = vector.broadcast %4 : vector<1x128xf32> to vector<128x128xf32>
    %6 = arith.addf %3, %5 : vector<128x128xf32>
    %cst_5 = arith.constant 0.000000e+00 : f32
    %7 = vector.broadcast %cst_5 : f32 to vector<128x128xf32>
    %8 = arith.maximumf %6, %7 : vector<128x128xf32>
    %9 = arith.truncf %8 : vector<128x128xf32> to vector<128x128xbf16>
    %c0_6 = arith.constant 0 : index
    %c0_7 = arith.constant 0 : index
    %10 = vector.load %arg4[%c0_6, %c0_7] : memref<128x128xbf16, #tpu.memory_space<vmem>>, vector<128x128xbf16>
    %cst_8 = arith.constant dense<0.000000e+00> : vector<128x128xf32>
    %11 = tpu.matmul %9, %10, %cst_8 {dimension_numbers = #tpu.dot_dimension_numbers<[1], [0], [0], [1], [0, 0, 1, 1], [], []>} : vector<128x128xbf16>, vector<128x128xbf16>, vector<128x128xf32> -> vector<128x128xf32>
    %c0_9 = arith.constant 0 : index
    %c0_10 = arith.constant 0 : index
    %12 = vector.load %arg5[%c0_9, %c0_10] : memref<1x128xf32, #tpu.memory_space<vmem>>, vector<1x128xf32>
    %13 = vector.broadcast %12 : vector<1x128xf32> to vector<128x128xf32>
    %14 = arith.addf %11, %13 : vector<128x128xf32>
    %cst_11 = arith.constant 0.000000e+00 : f32
    %15 = vector.broadcast %cst_11 : f32 to vector<128x128xf32>
    %16 = arith.maximumf %14, %15 : vector<128x128xf32>
    %c0_12 = arith.constant 0 : index
    %c0_13 = arith.constant 0 : index
    %17 = vector.load %arg6[%c0_12, %c0_13] : memref<1x128xbf16, #tpu.memory_space<vmem>>, vector<1x128xbf16>
    %18 = arith.truncf %16 : vector<128x128xf32> to vector<128x128xbf16>
    %cst_14 = arith.constant dense<0.000000e+00> : vector<1x128xf32>
    %19 = tpu.matmul %17, %18, %cst_14 {dimension_numbers = #tpu.dot_dimension_numbers<[1], [1], [0], [0], [0, 0, 1, 0], [], []>} : vector<1x128xbf16>, vector<128x128xbf16>, vector<1x128xf32> -> vector<1x128xf32>
    %c0_15 = arith.constant 0 : index
    %c0_16 = arith.constant 0 : index
    %20 = vector.load %arg7[%c0_15, %c0_16] : memref<1x128xf32, #tpu.memory_space<vmem>>, vector<1x128xf32>
    tpu.vector_store %arg7[%c0_15, %c0_16], %19 {strides = array<i32>} : memref<1x128xf32, #tpu.memory_space<vmem>>, vector<1x128xf32>,
    return
  }
  func.func @transform_0(%arg0: i32) -> (i32, i32) {
    %c0_i32 = arith.constant 0 : i32
    %c0_i32_0 = arith.constant 0 : i32
    return %arg0, %c0_i32 : i32, i32
  }
  func.func @transform_1(%arg0: i32) -> (i32, i32) {
    %c0_i32 = arith.constant 0 : i32
    %c0_i32_0 = arith.constant 0 : i32
    %c0_i32_1 = arith.constant 0 : i32
    return %c0_i32, %c0_i32_0 : i32, i32
  }
  func.func @transform_2(%arg0: i32) -> (i32, i32) {
    %c0_i32 = arith.constant 0 : i32
    %c0_i32_0 = arith.constant 0 : i32
    %c0_i32_1 = arith.constant 0 : i32
    return %c0_i32, %c0_i32_0 : i32, i32
  }
  func.func @transform_3(%arg0: i32) -> (i32, i32) {
    %c0_i32 = arith.constant 0 : i32
    %c0_i32_0 = arith.constant 0 : i32
    %c0_i32_1 = arith.constant 0 : i32
    return %c0_i32, %c0_i32_0 : i32, i32
  }
  func.func @transform_4(%arg0: i32) -> (i32, i32) {
    %c0_i32 = arith.constant 0 : i32
    %c0_i32_0 = arith.constant 0 : i32
    %c0_i32_1 = arith.constant 0 : i32
    return %c0_i32, %c0_i32_0 : i32, i32
  }
  func.func @transform_5(%arg0: i32) -> (i32, i32) {
    %c0_i32 = arith.constant 0 : i32
    %c0_i32_0 = arith.constant 0 : i32
    %c0_i32_1 = arith.constant 0 : i32
    return %c0_i32, %c0_i32_0 : i32, i32
  }
  func.func @transform_6(%arg0: i32) -> (i32, i32) {
    %c0_i32 = arith.constant 0 : i32
    %c0_i32_0 = arith.constant 0 : i32
    return %c0_i32, %arg0 : i32, i32
  }
}

</mosaic_0001>

<llo_original>
// kernel: tpu_custom_call.1
$region0: #{tpu_custom_call.1}
  #allocation0 [shape = 'u32[]', space=smem, size = 0x4, offset = 0x4, fixed_abs, tag = 'smem constant byte address 0x4 - core index']
  #allocation1 [shape = 'u32[144,128]{1,0:T(1,128)}', space=vmem, size = 0x12000, scoped, tag = 'internal scratch']
  %s0 = inlined_call_operand.vmem [shape: f32[384,8], index: 0, kind: input, shape index: {}]
  %s1 = inlined_call_operand.vmem [shape: bf16[8,128], index: 1, kind: input, shape index: {}]
  %s2 = inlined_call_operand.vmem [shape: f32[1,128], index: 2, kind: input, shape index: {}]
  %s3 = inlined_call_operand.vmem [shape: bf16[128,128], index: 3, kind: input, shape index: {}]
  %s4 = inlined_call_operand.vmem [shape: f32[1,128], index: 4, kind: input, shape index: {}]
  %s5 = inlined_call_operand.vmem [shape: bf16[1,128], index: 5, kind: input, shape index: {}]
  %s6 = inlined_call_operand.hbm [shape: f32[1,384], index: 6, kind: output, shape index: {}]
  %s7 = sld [smem:[#allocation0]]
  $region57: #{tpu_custom_call.1} parent=0
    _
  %s9 = ssub.s32 1, %s7
  %s10 = scalar_select 0, %s9, %s7
  $region1: #{tpu_custom_call.1} parent=0
    #allocation2 [shape = 'u8[1024]{0}', space=vmem, size = 0x400, scoped, tag = 'output window, operand 0']
    #allocation3 [shape = 's32[2]{0}', space=sflag, size = 0x8, scoped, tag = 'scoped memory for tpu_custom_call.1']
    %11 = vsyncpa [#allocation3], 0
    %s12 = scalar_lea.sflag [#allocation3], 1
    %13 = vsyncpa %s12, 0
    loop: start=0, step=1, limit=5
    $region2: #{tpu_custom_call.1} parent=1 // loop_pre_header
      _
    $region3: #{tpu_custom_call.1} parent=1 // loop_header
      %s15 = sphi 0, %s19
      %p16 = scmp.ge.s32.totalorder %s15, 5
      %s25 = sphi 0, %s27
      %s28 = sphi 0, %s25
      %s29 = sphi 0, %s28
      %s45 = sphi 0, %s29
      %s49 = sphi 0, %s49
      %s51 = sphi 0, %s49
      %s52 = sphi 0, %s51
      %s66 = sphi 0, %s52
      %s70 = sphi 0, %s70
      %s72 = sphi 0, %s70
      %s73 = sphi 0, %s72
      %s87 = sphi 0, %s73
      %s91 = sphi 0, %s91
      %s93 = sphi 0, %s91
      %s94 = sphi 0, %s93
      %s108 = sphi 0, %s94
      %s112 = sphi 0, %s112
      %s114 = sphi 0, %s112
      %s115 = sphi 0, %s114
      %s129 = sphi 0, %s115
      %s133 = sphi 0, %s133
      %s135 = sphi 0, %s133
      %s136 = sphi 0, %s135
      %s150 = sphi 0, %s136
      %s156 = sphi 0, %s158
      %s159 = sphi 0, %s156
      %s160 = sphi 0, %s159
      %s176 = sphi 0, %s160
    $region4: #{tpu_custom_call.1} parent=1 // loop_header_branch
      %18 = sbr.rel (%p16) target = $region8
    $region5: #{tpu_custom_call.1} parent=1 // loop_body
      %s20 = ssub.s32 %s15, 1
      %s21 = ssub.s32 %s15, 2
      %s22 = sadd.s32 %s15, 1
      %s23 = ssub.s32 %s15, %s22
      %p24 = scmp.eq.s32.totalorder %s23, 0
      %s26 = sadd.s32 %s25, 1
      %s27 = scalar_select %p24, %s25, %s26
      %p30 = pneg %p24
      %p31 = scmp.eq.s32.totalorder %s15, 2
      %p32 = por %p30, %p31
      %p33 = scmp.ne.s32.totalorder %s25, %s28
      %p34 = scmp.eq.s32.totalorder %s15, 0
      %p35 = por %p33, %p34
      %p36 = scmp.ne.s32.totalorder %s25, %s28
      %p37 = scmp.eq.s32.totalorder %s20, 2
      %p38 = por %p36, %p37
      %p39 = scmp.ne.s32.totalorder %s28, %s29
      %p40 = scmp.eq.s32.totalorder %s20, 0
      %p41 = por %p39, %p40
      %p42 = scmp.ne.s32.totalorder %s28, %s29
      %p43 = scmp.eq.s32.totalorder %s21, 2
      %p44 = por %p42, %p43
      %p46 = scmp.ne.s32.totalorder %s29, %s45
      %p47 = scmp.eq.s32.totalorder %s21, 0
      %p48 = por %p46, %p47
      %s50 = sadd.s32 %s49, 1
      %p53 = scmp.eq.s32.totalorder %s15, 2
      %p54 = scmp.ne.s32.totalorder %s49, %s51
      %p55 = scmp.eq.s32.totalorder %s15, 0
      %p56 = por %p54, %p55
      %p57 = scmp.ne.s32.totalorder %s49, %s51
      %p58 = scmp.eq.s32.totalorder %s20, 2
      %p59 = por %p57, %p58
      %p60 = scmp.ne.s32.totalorder %s51, %s52
      %p61 = scmp.eq.s32.totalorder %s20, 0
      %p62 = por %p60, %p61
      %p63 = scmp.ne.s32.totalorder %s51, %s52
      %p64 = scmp.eq.s32.totalorder %s21, 2
      %p65 = por %p63, %p64
      %p67 = scmp.ne.s32.totalorder %s52, %s66
      %p68 = scmp.eq.s32.totalorder %s21, 0
      %p69 = por %p67, %p68
      %s71 = sadd.s32 %s70, 1
      %p74 = scmp.eq.s32.totalorder %s15, 2
      %p75 = scmp.ne.s32.totalorder %s70, %s72
      %p76 = scmp.eq.s32.totalorder %s15, 0
      %p77 = por %p75, %p76
      %p78 = scmp.ne.s32.totalorder %s70, %s72
      %p79 = scmp.eq.s32.totalorder %s20, 2
      %p80 = por %p78, %p79
      %p81 = scmp.ne.s32.totalorder %s72, %s73
      %p82 = scmp.eq.s32.totalorder %s20, 0
      %p83 = por %p81, %p82
      %p84 = scmp.ne.s32.totalorder %s72, %s73
      %p85 = scmp.eq.s32.totalorder %s21, 2
      %p86 = por %p84, %p85
      %p88 = scmp.ne.s32.totalorder %s73, %s87
      %p89 = scmp.eq.s32.totalorder %s21, 0
      %p90 = por %p88, %p89
      %s92 = sadd.s32 %s91, 1
      %p95 = scmp.eq.s32.totalorder %s15, 2
      %p96 = scmp.ne.s32.totalorder %s91, %s93
      %p97 = scmp.eq.s32.totalorder %s15, 0
      %p98 = por %p96, %p97
      %p99 = scmp.ne.s32.totalorder %s91, %s93
      %p100 = scmp.eq.s32.totalorder %s20, 2
      %p101 = por %p99, %p100
      %p102 = scmp.ne.s32.totalorder %s93, %s94
      %p103 = scmp.eq.s32.totalorder %s20, 0
      %p104 = por %p102, %p103
      %p105 = scmp.ne.s32.totalorder %s93, %s94
      %p106 = scmp.eq.s32.totalorder %s21, 2
      %p107 = por %p105, %p106
      %p109 = scmp.ne.s32.totalorder %s94, %s108
      %p110 = scmp.eq.s32.totalorder %s21, 0
      %p111 = por %p109, %p110
      %s113 = sadd.s32 %s112, 1
      %p116 = scmp.eq.s32.totalorder %s15, 2
      %p117 = scmp.ne.s32.totalorder %s112, %s114
      %p118 = scmp.eq.s32.totalorder %s15, 0
      %p119 = por %p117, %p118
      %p120 = scmp.ne.s32.totalorder %s112, %s114
      %p121 = scmp.eq.s32.totalorder %s20, 2
      %p122 = por %p120, %p121
      %p123 = scmp.ne.s32.totalorder %s114, %s115
      %p124 = scmp.eq.s32.totalorder %s20, 0
      %p125 = por %p123, %p124
      %p126 = scmp.ne.s32.totalorder %s114, %s115
      %p127 = scmp.eq.s32.totalorder %s21, 2
      %p128 = por %p126, %p127
      %p130 = scmp.ne.s32.totalorder %s115, %s129
      %p131 = scmp.eq.s32.totalorder %s21, 0
      %p132 = por %p130, %p131
      %s134 = sadd.s32 %s133, 1
      %p137 = scmp.eq.s32.totalorder %s15, 2
      %p138 = scmp.ne.s32.totalorder %s133, %s135
      %p139 = scmp.eq.s32.totalorder %s15, 0
      %p140 = por %p138, %p139
      %p141 = scmp.ne.s32.totalorder %s133, %s135
      %p142 = scmp.eq.s32.totalorder %s20, 2
      %p143 = por %p141, %p142
      %p144 = scmp.ne.s32.totalorder %s135, %s136
      %p145 = scmp.eq.s32.totalorder %s20, 0
      %p146 = por %p144, %p145
      %p147 = scmp.ne.s32.totalorder %s135, %s136
      %p148 = scmp.eq.s32.totalorder %s21, 2
      %p149 = por %p147, %p148
      %p151 = scmp.ne.s32.totalorder %s136, %s150
      %p152 = scmp.eq.s32.totalorder %s21, 0
      %p153 = por %p151, %p152
      %s154 = ssub.s32 %s15, %s22
      %p155 = scmp.eq.s32.totalorder %s154, 0
      %s157 = sadd.s32 %s156, 1
      %s158 = scalar_select %p155, %s156, %s157
      %p161 = pneg %p155
      %p162 = scmp.eq.s32.totalorder %s15, 2
      %p163 = por %p161, %p162
      %p164 = scmp.ne.s32.totalorder %s156, %s159
      %p165 = scmp.eq.s32.totalorder %s15, 0
      %p166 = por %p164, %p165
      %p167 = scmp.ne.s32.totalorder %s156, %s159
      %p168 = scmp.eq.s32.totalorder %s20, 2
      %p169 = por %p167, %p168
      %p170 = scmp.ne.s32.totalorder %s159, %s160
      %p171 = scmp.eq.s32.totalorder %s20, 0
      %p172 = por %p170, %p171
      %p173 = scmp.ne.s32.totalorder %s159, %s160
      %p174 = scmp.eq.s32.totalorder %s21, 2
      %p175 = por %p173, %p174
      %p177 = scmp.ne.s32.totalorder %s160, %s176
      %p178 = scmp.eq.s32.totalorder %s21, 0
      %p179 = por %p177, %p178
      %p180 = scmp.le.s32.totalorder 1, %s15
      %p181 = scmp.lt.s32.totalorder %s15, 4
      %p182 = pnand %p180, %p181
      %p183 = pneg %p182
      // Predicated region
      $region9: #{tpu_custom_call.1} parent=5 // pred_check
        _
      $region10: #{tpu_custom_call.1} parent=5 // pred_check_branch
        %185 = sbr.rel (%p182) target = $region12
      $region11: #{tpu_custom_call.1} parent=5 // pred_region
        %s186 = ssub.s32 %s15, 1
        // Predicated region
        $region13: #{tpu_custom_call.1} parent=11 // pred_check
          %p187 = pneg %p62
        $region14: #{tpu_custom_call.1} parent=11 // pred_check_branch
          %189 = sbr.rel (%p187) target = $region16
        $region15: #{tpu_custom_call.1} parent=11 // pred_region
          _
        $region16: #{tpu_custom_call.1} parent=11 // pred_fallthru
          _
        // Predicated region
        $region17: #{tpu_custom_call.1} parent=11 // pred_check
          %p190 = pneg %p83
        $region18: #{tpu_custom_call.1} parent=11 // pred_check_branch
          %192 = sbr.rel (%p190) target = $region20
        $region19: #{tpu_custom_call.1} parent=11 // pred_region
          _
        $region20: #{tpu_custom_call.1} parent=11 // pred_fallthru
          _
        // Predicated region
        $region21: #{tpu_custom_call.1} parent=11 // pred_check
          %p193 = pneg %p104
        $region22: #{tpu_custom_call.1} parent=11 // pred_check_branch
          %195 = sbr.rel (%p193) target = $region24
        $region23: #{tpu_custom_call.1} parent=11 // pred_region
          _
        $region24: #{tpu_custom_call.1} parent=11 // pred_fallthru
          _
        // Predicated region
        $region25: #{tpu_custom_call.1} parent=11 // pred_check
          %p196 = pneg %p125
        $region26: #{tpu_custom_call.1} parent=11 // pred_check_branch
          %198 = sbr.rel (%p196) target = $region28
        $region27: #{tpu_custom_call.1} parent=11 // pred_region
          _
        $region28: #{tpu_custom_call.1} parent=11 // pred_fallthru
          _
        // Predicated region
        $region29: #{tpu_custom_call.1} parent=11 // pred_check
          %p199 = pneg %p146
        $region30: #{tpu_custom_call.1} parent=11 // pred_check_branch
          %201 = sbr.rel (%p199) target = $region32
        $region31: #{tpu_custom_call.1} parent=11 // pred_region
          _
        $region32: #{tpu_custom_call.1} parent=11 // pred_fallthru
          _
      $region12: #{tpu_custom_call.1} parent=5 // pred_fallthru
        _
      %p202 = scmp.lt.s32.totalorder %s15, 3
      // Predicated region
      $region33: #{tpu_custom_call.1} parent=5 // pred_check
        %p203 = pneg %p202
      $region34: #{tpu_custom_call.1} parent=5 // pred_check_branch
        %205 = sbr.rel (%p203) target = $region36
      $region35: #{tpu_custom_call.1} parent=5 // pred_region
        // Predicated region
        $region37: #{tpu_custom_call.1} parent=35 // pred_check
          %p206 = pneg %p35
        $region38: #{tpu_custom_call.1} parent=35 // pred_check_branch
          %208 = sbr.rel (%p206) target = $region40
        $region39: #{tpu_custom_call.1} parent=35 // pred_region
          %s209 = smul.u32 16, %s15
          %p210 = scmp.lt.s32.totalorder %s209, 47
          %s211 = scalar_select %p210, %s209, 47
          %s212 = smul.addr %s211, 8
          %s213 = scalar_lea.vmem %s0, %s212
          %s214 = smul.u32 16, %s15
        $region40: #{tpu_custom_call.1} parent=35 // pred_fallthru
          _
      $region36: #{tpu_custom_call.1} parent=5 // pred_fallthru
        _
      %p215 = scmp.le.s32.totalorder 1, %s15
      %p216 = scmp.lt.s32.totalorder %s15, 4
      %p217 = pnand %p215, %p216
      %p218 = pneg %p217
      // Predicated region
      $region41: #{tpu_custom_call.1} parent=5 // pred_check
        _
      $region42: #{tpu_custom_call.1} parent=5 // pred_check_branch
        %220 = sbr.rel (%p217) target = $region44
      $region43: #{tpu_custom_call.1} parent=5 // pred_region
        %s221 = ssub.s32 %s15, 1
        %s222 = smul.u32 16, %s20
        %p223 = scmp.lt.s32.totalorder %s222, 47
        %s224 = scalar_select %p223, %s222, 47
        %s225 = smul.addr %s224, 8
        %s226 = scalar_lea.vmem %s0, %s225
        %p227 = pneg %p41
        %p228 = pneg %p38
        %p229 = pneg %p62
        %p230 = pneg %p59
        %p231 = pneg %p83
        %p232 = pneg %p80
        %p233 = pneg %p104
        %p234 = pneg %p101
        %p235 = pneg %p125
        %p236 = pneg %p122
        %p237 = pneg %p146
        %p238 = pneg %p143
        %p239 = pneg %p172
        %p240 = pneg %p169
        %s241 = sand.u32 %s159, 1
        %s242 = scalar_lea.sflag [#allocation3], %s241
        %s243 = sand.u32 %s159, 1
        %s244 = scalar_lea.vmem [#allocation2], %s243
        %s245 = smul.u32 16, %s20
        %p246 = scmp.lt.s32.totalorder %s245, 47
        %s247 = scalar_select %p246, %s245, 47
        %s248 = smul.addr %s247, 8
        %s249 = scalar_lea.vmem %s0, %s248
        %s250 = smul.u32 16, %s20
        %v252 = vld [vmem:[%s249] sm:$0xff]
        %v253 = vld [vmem:[%s249 + $0x8] sm:$0xff]
        %v254 = vld [vmem:[%s249 + $0x10] sm:$0xff]
        %v255 = vld [vmem:[%s249 + $0x18] sm:$0xff]
        %v256 = vld [vmem:[%s249 + $0x20] sm:$0xff]
        %v257 = vld [vmem:[%s249 + $0x28] sm:$0xff]
        %v258 = vld [vmem:[%s249 + $0x30] sm:$0xff]
        %v259 = vld [vmem:[%s249 + $0x38] sm:$0xff]
        %v260 = vld [vmem:[%s249 + $0x40] sm:$0xff]
        %v261 = vld [vmem:[%s249 + $0x48] sm:$0xff]
        %v262 = vld [vmem:[%s249 + $0x50] sm:$0xff]
        %v263 = vld [vmem:[%s249 + $0x58] sm:$0xff]
        %v264 = vld [vmem:[%s249 + $0x60] sm:$0xff]
        %v265 = vld [vmem:[%s249 + $0x68] sm:$0xff]
        %v266 = vld [vmem:[%s249 + $0x70] sm:$0xff]
        %v267 = vld [vmem:[%s249 + $0x78] sm:$0xff]
        %v268 = vpack.c.bf16 %v253, %v252
        %v269 = vpack.c.bf16 %v255, %v254
        %v270 = vpack.c.bf16 %v257, %v256
        %v271 = vpack.c.bf16 %v259, %v258
        %v272 = vpack.c.bf16 %v261, %v260
        %v273 = vpack.c.bf16 %v263, %v262
        %v274 = vpack.c.bf16 %v265, %v264
        %v275 = vpack.c.bf16 %v267, %v266
        %v276 = vld [vmem:[%s1] sm:$0xf]
        %v277 = vld [vmem:[%s2] sm:$0x1]
        %v279 = vlaneseq
        %v280 = vshrl.u32 %v279, 7
        %v281 = vsub.s32 0, %v280
        %v282 = vrot.slane %v277, %v281
        %vm284 = vcmask 64512
        %v286 = vsel %vm284, %v268, 0
        %v289 = vsel %vm284, %v269, 0
        %v292 = vsel %vm284, %v270, 0
        %v295 = vsel %vm284, %v271, 0
        %v298 = vsel %vm284, %v272, 0
        %v301 = vsel %vm284, %v273, 0
        %v304 = vsel %vm284, %v274, 0
        %v307 = vsel %vm284, %v275, 0
        %vm309 = vcmask 1043456
        %v311 = vsel %vm309, %v276, 0
        %313 = vmatprep.subr.bf16.mxu0 0
        %314 = vmatpush1.bf16.msra.mxu0 0
        %315 = vmatprep.subr.bf16.mxu0 0
        %316 = vmatpush1.bf16.msra.mxu0 0
        %317 = vmatprep.subr.bf16.mxu0 0
        %318 = vmatpush1.bf16.msra.mxu0 0
        %319 = vmatprep.subr.bf16.mxu0 0
        %320 = vmatpush1.bf16.msra.mxu0 0
        %321 = vmatprep.subr.bf16.mxu0 0
        %322 = vmatpush1.bf16.msra.mxu0 0
        %323 = vmatprep.subr.bf16.mxu0 0
        %324 = vmatpush1.bf16.msra.mxu0 0
        %325 = vmatprep.subr.bf16.mxu0 0
        %326 = vmatpush1.bf16.msra.mxu0 0
        %327 = vmatprep.subr.bf16.mxu0 0
        %328 = vmatpush1.bf16.msra.mxu0 %v311
        %329 = vmatprep.subr.bf16.mxu0 0
        %330 = vmatpush2.bf16.msra.mxu0 0
        %331 = vmatprep.subr.bf16.mxu0 0
        %332 = vmatpush2.bf16.msra.mxu0 0
        %333 = vmatprep.subr.bf16.mxu0 0
        %334 = vmatpush2.bf16.msra.mxu0 0
        %335 = vmatprep.subr.bf16.mxu0 0
        %336 = vmatpush2.bf16.msra.mxu0 0
        %337 = vmatprep.subr.bf16.mxu0 0
        %338 = vmatpush2.bf16.msra.mxu0 0
        %339 = vmatprep.subr.bf16.mxu0 0
        %340 = vmatpush2.bf16.msra.mxu0 0
        %341 = vmatprep.subr.bf16.mxu0 0
        %342 = vmatpush2.bf16.msra.mxu0 0
        %343 = vmatprep.subr.bf16.mxu0 0
        %344 = vmatpush2.bf16.msra.mxu0 0
        %345 = vmatprep.mubr.bf16.mxu0 0
        %346 = vmatmul.mubr.bf16.gmra.mxu0 %v286
        %v347 = vpop.f32.mrf.mxu0
        %v348 = vadd.f32 %v282, %v347
        %v349 = vpop.f32.mrf.mxu0
        %v350 = vpop.f32.mrf.mxu0
        %v351 = vadd.f32 %v282, %v350
        %v352 = vpop.f32.mrf.mxu0
        %353 = vmatprep.mubr.bf16.mxu0 0
        %354 = vmatmul.mubr.bf16.gmra.mxu0 %v289
        %v355 = vpop.f32.mrf.mxu0
        %v356 = vadd.f32 %v282, %v355
        %v357 = vpop.f32.mrf.mxu0
        %v358 = vpop.f32.mrf.mxu0
        %v359 = vadd.f32 %v282, %v358
        %v360 = vpop.f32.mrf.mxu0
        %361 = vmatprep.mubr.bf16.mxu0 0
        %362 = vmatmul.mubr.bf16.gmra.mxu0 %v292
        %v363 = vpop.f32.mrf.mxu0
        %v364 = vadd.f32 %v282, %v363
        %v365 = vpop.f32.mrf.mxu0
        %v366 = vpop.f32.mrf.mxu0
        %v367 = vadd.f32 %v282, %v366
        %v368 = vpop.f32.mrf.mxu0
        %369 = vmatprep.mubr.bf16.mxu0 0
        %370 = vmatmul.mubr.bf16.gmra.mxu0 %v295
        %v371 = vpop.f32.mrf.mxu0
        %v372 = vadd.f32 %v282, %v371
        %v373 = vpop.f32.mrf.mxu0
        %v374 = vpop.f32.mrf.mxu0
        %v375 = vadd.f32 %v282, %v374
        %v376 = vpop.f32.mrf.mxu0
        %377 = vmatprep.mubr.bf16.mxu0 0
        %378 = vmatmul.mubr.bf16.gmra.mxu0 %v298
        %v379 = vpop.f32.mrf.mxu0
        %v380 = vadd.f32 %v282, %v379
        %v381 = vpop.f32.mrf.mxu0
        %v382 = vpop.f32.mrf.mxu0
        %v383 = vadd.f32 %v282, %v382
        %v384 = vpop.f32.mrf.mxu0
        %385 = vmatprep.mubr.bf16.mxu0 0
        %386 = vmatmul.mubr.bf16.gmra.mxu0 %v301
        %v387 = vpop.f32.mrf.mxu0
        %v388 = vadd.f32 %v282, %v387
        %v389 = vpop.f32.mrf.mxu0
        %v390 = vpop.f32.mrf.mxu0
        %v391 = vadd.f32 %v282, %v390
        %v392 = vpop.f32.mrf.mxu0
        %393 = vmatprep.mubr.bf16.mxu0 0
        %394 = vmatmul.mubr.bf16.gmra.mxu0 %v304
        %v395 = vpop.f32.mrf.mxu0
        %v396 = vadd.f32 %v282, %v395
        %v397 = vpop.f32.mrf.mxu0
        %v398 = vpop.f32.mrf.mxu0
        %v399 = vadd.f32 %v282, %v398
        %v400 = vpop.f32.mrf.mxu0
        %401 = vmatprep.mubr.bf16.mxu0 0
        %402 = vmatmul.mubr.bf16.gmra.mxu0 %v307
        %v403 = vpop.f32.mrf.mxu0
        %v404 = vadd.f32 %v282, %v403
        %v405 = vpop.f32.mrf.mxu0
        %v406 = vpop.f32.mrf.mxu0
        %v407 = vadd.f32 %v282, %v406
        %v408 = vpop.f32.mrf.mxu0
        %409 = vdwg.mxu0
        %v410 = vmax.f32 %v348, 0.0
        %v411 = vmax.f32 %v351, 0.0
        %v412 = vmax.f32 %v356, 0.0
        %v413 = vmax.f32 %v359, 0.0
        %v414 = vmax.f32 %v364, 0.0
        %v415 = vmax.f32 %v367, 0.0
        %v416 = vmax.f32 %v372, 0.0
        %v417 = vmax.f32 %v375, 0.0
        %v418 = vmax.f32 %v380, 0.0
        %v419 = vmax.f32 %v383, 0.0
        %v420 = vmax.f32 %v388, 0.0
        %v421 = vmax.f32 %v391, 0.0
        %v422 = vmax.f32 %v396, 0.0
        %v423 = vmax.f32 %v399, 0.0
        %v424 = vmax.f32 %v404, 0.0
        %v425 = vmax.f32 %v407, 0.0
        %v426 = vpack.c.bf16 %v411, %v410
        %v427 = vpack.c.bf16 %v413, %v412
        %v428 = vpack.c.bf16 %v415, %v414
        %v429 = vpack.c.bf16 %v417, %v416
        %v430 = vpack.c.bf16 %v419, %v418
        %v431 = vpack.c.bf16 %v421, %v420
        %v432 = vpack.c.bf16 %v423, %v422
        %v433 = vpack.c.bf16 %v425, %v424
        %v434 = vld [vmem:[%s3] sm:$0xf]
        %v435 = vld [vmem:[%s3 + $0x4] sm:$0xf]
        %v436 = vld [vmem:[%s3 + $0x8] sm:$0xf]
        %v437 = vld [vmem:[%s3 + $0xc] sm:$0xf]
        %v438 = vld [vmem:[%s3 + $0x10] sm:$0xf]
        %v439 = vld [vmem:[%s3 + $0x14] sm:$0xf]
        %v440 = vld [vmem:[%s3 + $0x18] sm:$0xf]
        %v441 = vld [vmem:[%s3 + $0x1c] sm:$0xf]
        %v442 = vld [vmem:[%s3 + $0x20] sm:$0xf]
        %v443 = vld [vmem:[%s3 + $0x24] sm:$0xf]
        %v444 = vld [vmem:[%s3 + $0x28] sm:$0xf]
        %v445 = vld [vmem:[%s3 + $0x2c] sm:$0xf]
        %v446 = vld [vmem:[%s3 + $0x30] sm:$0xf]
        %v447 = vld [vmem:[%s3 + $0x34] sm:$0xf]
        %v448 = vld [vmem:[%s3 + $0x38] sm:$0xf]
        %v449 = vld [vmem:[%s3 + $0x3c] sm:$0xf]
        %v450 = vld [vmem:[%s4] sm:$0x1]
        %v452 = vlaneseq
        %v453 = vshrl.u32 %v452, 7
        %v454 = vsub.s32 0, %v453
        %v455 = vrot.slane %v450, %v454
        %v473 = vunpack.c.l.b16 %v434
        %v474 = vunpack.c.l.b16 %v435
        %v475 = vunpack.c.l.b16 %v436
        %v476 = vunpack.c.l.b16 %v437
        %v477 = vunpack.c.l.b16 %v438
        %v478 = vunpack.c.l.b16 %v439
        %v479 = vunpack.c.l.b16 %v440
        %v480 = vunpack.c.l.b16 %v441
        %v481 = vunpack.c.l.b16 %v442
        %v482 = vunpack.c.l.b16 %v443
        %v483 = vunpack.c.l.b16 %v444
        %v484 = vunpack.c.l.b16 %v445
        %v485 = vunpack.c.l.b16 %v446
        %v486 = vunpack.c.l.b16 %v447
        %v487 = vunpack.c.l.b16 %v448
        %v488 = vunpack.c.l.b16 %v449
        %v489 = vpack.c.b16 %v474, %v473
        %v490 = vpack.c.b16 %v476, %v475
        %v491 = vpack.c.b16 %v478, %v477
        %v492 = vpack.c.b16 %v480, %v479
        %v493 = vpack.c.b16 %v482, %v481
        %v494 = vpack.c.b16 %v484, %v483
        %v495 = vpack.c.b16 %v486, %v485
        %v496 = vpack.c.b16 %v488, %v487
        %505 = vmatprep.subr.bf16.mxu0 0
        %506 = vmatpush1.bf16.msra.mxu0 %v496
        %507 = vmatprep.subr.bf16.mxu0 0
        %508 = vmatpush1.bf16.msra.mxu0 %v495
        %509 = vmatprep.subr.bf16.mxu0 0
        %510 = vmatpush1.bf16.msra.mxu0 %v494
        %511 = vmatprep.subr.bf16.mxu0 0
        %512 = vmatpush1.bf16.msra.mxu0 %v493
        %513 = vmatprep.subr.bf16.mxu0 0
        %514 = vmatpush1.bf16.msra.mxu0 %v492
        %515 = vmatprep.subr.bf16.mxu0 0
        %516 = vmatpush1.bf16.msra.mxu0 %v491
        %517 = vmatprep.subr.bf16.mxu0 0
        %518 = vmatpush1.bf16.msra.mxu0 %v490
        %519 = vmatprep.subr.bf16.mxu0 0
        %520 = vmatpush1.bf16.msra.mxu0 %v489
        %521 = vmatprep.subr.bf16.mxu0 0
        %522 = vmatpush2.bf16.msra.mxu0 0
        %523 = vmatprep.subr.bf16.mxu0 0
        %524 = vmatpush2.bf16.msra.mxu0 0
        %525 = vmatprep.subr.bf16.mxu0 0
        %526 = vmatpush2.bf16.msra.mxu0 0
        %527 = vmatprep.subr.bf16.mxu0 0
        %528 = vmatpush2.bf16.msra.mxu0 0
        %529 = vmatprep.subr.bf16.mxu0 0
        %530 = vmatpush2.bf16.msra.mxu0 0
        %531 = vmatprep.subr.bf16.mxu0 0
        %532 = vmatpush2.bf16.msra.mxu0 0
        %533 = vmatprep.subr.bf16.mxu0 0
        %534 = vmatpush2.bf16.msra.mxu0 0
        %535 = vmatprep.subr.bf16.mxu0 0
        %536 = vmatpush2.bf16.msra.mxu0 0
        %537 = vmatprep.mubr.bf16.mxu0 0
        %538 = vmatmul.mubr.bf16.gmra.mxu0 %v426
        %v539 = vpop.f32.mrf.mxu0
        %v540 = vadd.f32 %v455, %v539
        %v541 = vpop.f32.mrf.mxu0
        %v542 = vpop.f32.mrf.mxu0
        %v543 = vadd.f32 %v455, %v542
        %v544 = vpop.f32.mrf.mxu0
        %545 = vmatprep.mubr.bf16.mxu0 0
        %546 = vmatmul.mubr.bf16.gmra.mxu0 %v427
        %v547 = vpop.f32.mrf.mxu0
        %v548 = vadd.f32 %v455, %v547
        %v549 = vpop.f32.mrf.mxu0
        %v550 = vpop.f32.mrf.mxu0
        %v551 = vadd.f32 %v455, %v550
        %v552 = vpop.f32.mrf.mxu0
        %553 = vmatprep.mubr.bf16.mxu0 0
        %554 = vmatmul.mubr.bf16.gmra.mxu0 %v428
        %v555 = vpop.f32.mrf.mxu0
        %v556 = vadd.f32 %v455, %v555
        %v557 = vpop.f32.mrf.mxu0
        %v558 = vpop.f32.mrf.mxu0
        %v559 = vadd.f32 %v455, %v558
        %v560 = vpop.f32.mrf.mxu0
        %561 = vmatprep.mubr.bf16.mxu0 0
        %562 = vmatmul.mubr.bf16.gmra.mxu0 %v429
        %v563 = vpop.f32.mrf.mxu0
        %v564 = vadd.f32 %v455, %v563
        %v565 = vpop.f32.mrf.mxu0
        %v566 = vpop.f32.mrf.mxu0
        %v567 = vadd.f32 %v455, %v566
        %v568 = vpop.f32.mrf.mxu0
        %569 = vmatprep.mubr.bf16.mxu0 0
        %570 = vmatmul.mubr.bf16.gmra.mxu0 %v430
        %v571 = vpop.f32.mrf.mxu0
        %v572 = vadd.f32 %v455, %v571
        %v573 = vpop.f32.mrf.mxu0
        %v574 = vpop.f32.mrf.mxu0
        %v575 = vadd.f32 %v455, %v574
        %v576 = vpop.f32.mrf.mxu0
        %577 = vmatprep.mubr.bf16.mxu0 0
        %578 = vmatmul.mubr.bf16.gmra.mxu0 %v431
        %v579 = vpop.f32.mrf.mxu0
        %v580 = vadd.f32 %v455, %v579
        %v581 = vpop.f32.mrf.mxu0
        %v582 = vpop.f32.mrf.mxu0
        %v583 = vadd.f32 %v455, %v582
        %v584 = vpop.f32.mrf.mxu0
        %585 = vmatprep.mubr.bf16.mxu0 0
        %586 = vmatmul.mubr.bf16.gmra.mxu0 %v432
        %v587 = vpop.f32.mrf.mxu0
        %v588 = vadd.f32 %v455, %v587
        %v589 = vpop.f32.mrf.mxu0
        %v590 = vpop.f32.mrf.mxu0
        %v591 = vadd.f32 %v455, %v590
        %v592 = vpop.f32.mrf.mxu0
        %593 = vmatprep.mubr.bf16.mxu0 0
        %594 = vmatmul.mubr.bf16.gmra.mxu0 %v433
        %v595 = vpop.f32.mrf.mxu0
        %v596 = vadd.f32 %v455, %v595
        %v597 = vpop.f32.mrf.mxu0
        %v598 = vpop.f32.mrf.mxu0
        %v599 = vadd.f32 %v455, %v598
        %v600 = vpop.f32.mrf.mxu0
        %601 = vdwg.mxu0
        %v602 = vmax.f32 %v540, 0.0
        %v603 = vmax.f32 %v543, 0.0
        %v604 = vmax.f32 %v548, 0.0
        %v605 = vmax.f32 %v551, 0.0
        %v606 = vmax.f32 %v556, 0.0
        %v607 = vmax.f32 %v559, 0.0
        %v608 = vmax.f32 %v564, 0.0
        %v609 = vmax.f32 %v567, 0.0
        %v610 = vmax.f32 %v572, 0.0
        %v611 = vmax.f32 %v575, 0.0
        %v612 = vmax.f32 %v580, 0.0
        %v613 = vmax.f32 %v583, 0.0
        %v614 = vmax.f32 %v588, 0.0
        %v615 = vmax.f32 %v591, 0.0
        %v616 = vmax.f32 %v596, 0.0
        %v617 = vmax.f32 %v599, 0.0
        %v618 = vld [vmem:[%s5] sm:$0x1]
        %v619 = vpack.c.bf16 %v603, %v602
        %v620 = vpack.c.bf16 %v605, %v604
        %v621 = vpack.c.bf16 %v607, %v606
        %v622 = vpack.c.bf16 %v609, %v608
        %v623 = vpack.c.bf16 %v611, %v610
        %v624 = vpack.c.bf16 %v613, %v612
        %v625 = vpack.c.bf16 %v615, %v614
        %v626 = vpack.c.bf16 %v617, %v616
        %627 = vmatprep.subr.bf16.mxu0 0
        %628 = vmatpush1.bf16.xpose.msra.mxu0 %v626
        %629 = vmatprep.subr.bf16.mxu0 0
        %630 = vmatpush1.bf16.xpose.msra.mxu0 %v625
        %631 = vmatprep.subr.bf16.mxu0 0
        %632 = vmatpush1.bf16.xpose.msra.mxu0 %v624
        %633 = vmatprep.subr.bf16.mxu0 0
        %634 = vmatpush1.bf16.xpose.msra.mxu0 %v623
        %635 = vmatprep.subr.bf16.mxu0 0
        %636 = vmatpush1.bf16.xpose.msra.mxu0 %v622
        %637 = vmatprep.subr.bf16.mxu0 0
        %638 = vmatpush1.bf16.xpose.msra.mxu0 %v621
        %639 = vmatprep.subr.bf16.mxu0 0
        %640 = vmatpush1.bf16.xpose.msra.mxu0 %v620
        %641 = vmatprep.subr.bf16.mxu0 0
        %642 = vmatpush1.bf16.xpose.msra.mxu0 %v619
        %643 = vmatprep.subr.bf16.mxu0 0
        %644 = vmatpush2.bf16.xpose.msra.mxu0 0
        %645 = vmatprep.subr.bf16.mxu0 0
        %646 = vmatpush2.bf16.xpose.msra.mxu0 0
        %647 = vmatprep.subr.bf16.mxu0 0
        %648 = vmatpush2.bf16.xpose.msra.mxu0 0
        %649 = vmatprep.subr.bf16.mxu0 0
        %650 = vmatpush2.bf16.xpose.msra.mxu0 0
        %651 = vmatprep.subr.bf16.mxu0 0
        %652 = vmatpush2.bf16.xpose.msra.mxu0 0
        %653 = vmatprep.subr.bf16.mxu0 0
        %654 = vmatpush2.bf16.xpose.msra.mxu0 0
        %655 = vmatprep.subr.bf16.mxu0 0
        %656 = vmatpush2.bf16.xpose.msra.mxu0 0
        %657 = vmatprep.subr.bf16.mxu0 0
        %658 = vmatpush2.bf16.xpose.msra.mxu0 0
        %659 = vmatprep.mubr.bf16.mxu0 0
        %660 = vmatmul.mubr.bf16.gmra.mxu0 %v618
        %v661 = vpop.f32.mrf.mxu0
        %v662 = vadd.f32 0.0, %v661
        %v663 = vpop.f32.mrf.mxu0
        %v664 = vpop.f32.mrf.mxu0
        %v665 = vpop.f32.mrf.mxu0
        %666 = vdwg.mxu0
        %667 = vst [vmem:[%s244] sm:$0x1] %v662
        %s668 = sand.u32 %s159, 1
        %s669 = scalar_lea.sflag [#allocation3], %s668
        %s670 = sand.u32 %s159, 1
        %s671 = scalar_lea.vmem [#allocation2], %s670
        // Predicated region
        $region45: #{tpu_custom_call.1} parent=43 // pred_check
          %p672 = pneg %p169
        $region46: #{tpu_custom_call.1} parent=43 // pred_check_branch
          %674 = sbr.rel (%p672) target = $region48
        $region47: #{tpu_custom_call.1} parent=43 // pred_region
          %s676 = ssub.s32 16, 16
          %677 = vsyncadd %s669, %s676
          %s678 = smul.addr %s20, 16
          %s679 = scalar_lea.hbm %s6, %s678
          %s681 = sshll.u32 %s671, 4
          %s682 = int_to_ptr.vmem [resolvable:$true] %s681
          %684 = dma.vmem_to_hbm [thread:$0]  %s682, 16, %s679, %s669
        $region48: #{tpu_custom_call.1} parent=43 // pred_fallthru
          _
      $region44: #{tpu_custom_call.1} parent=5 // pred_fallthru
        _
      %p685 = scmp.le.s32.totalorder 2, %s15
      // Predicated region
      $region49: #{tpu_custom_call.1} parent=5 // pred_check
        %p686 = pneg %p685
      $region50: #{tpu_custom_call.1} parent=5 // pred_check_branch
        %688 = sbr.rel (%p686) target = $region52
      $region51: #{tpu_custom_call.1} parent=5 // pred_region
        %s689 = ssub.s32 %s15, 2
        // Predicated region
        $region53: #{tpu_custom_call.1} parent=51 // pred_check
          %p690 = pneg %p175
        $region54: #{tpu_custom_call.1} parent=51 // pred_check_branch
          %692 = sbr.rel (%p690) target = $region56
        $region55: #{tpu_custom_call.1} parent=51 // pred_region
          %s693 = sand.u32 %s160, 1
          %s694 = scalar_lea.sflag [#allocation3], %s693
          %s695 = sand.u32 %s160, 1
          %s696 = scalar_lea.vmem [#allocation2], %s695
          %697 = dma.done %s694, 16
        $region56: #{tpu_custom_call.1} parent=51 // pred_fallthru
          _
      $region52: #{tpu_custom_call.1} parent=5 // pred_fallthru
        _
    $region6: #{tpu_custom_call.1} parent=1 // loop_footer
      %s19 = sadd.s32 1, %s15
    $region7: #{tpu_custom_call.1} parent=1 // loop_footer_branch
      %14 = sbr.rel target = $region3
    $region8: #{tpu_custom_call.1} parent=1 // loop_exit
      _
    %698 = vsyncpa [#allocation3], 1
    %s699 = scalar_lea.sflag [#allocation3], 1
    %700 = vsyncpa %s699, 1

</llo_original>
